<compile_context>
chip_gen: v7x
topology: tpu7x:2x2x1
jax: 0.10.0
libtpu: 0.0.40
codegen_flags: <defaults>
</compile_context>

<pallas_src>
import jax
import jax.numpy as jnp
from jax.experimental import pallas as pl
from jax.experimental.pallas import tpu as pltpu

_MIB = 1024 * 1024


def _residual_add_kernel(res_ref, x_ref, out_ref):
    # Elementwise add on the VPU for the current VMEM tile.
    out_ref[...] = res_ref[...] + x_ref[...]


def _sublane_multiple(dtype):
    itemsize = jnp.dtype(dtype).itemsize
    if itemsize >= 4:
        return 8
    if itemsize == 2:
        return 16
    return 32


def _pick_lanes(n):
    # Widest lane-dense last dim that divides the flat length (no padding).
    for lanes in (2048, 1024, 512, 256, 128):
        if n % lanes == 0:
            return lanes
    return None


_CHIP_CONFIG = None


def _get_chip_config():
    """(tile_bytes_per_array, vmem_limit_bytes_or_None, min_grid_steps)."""
    global _CHIP_CONFIG
    if _CHIP_CONFIG is not None:
        return _CHIP_CONFIG

    vmem_cap = None
    try:
        info = pltpu.get_tpu_info()
        vmem_cap = getattr(info, "vmem_capacity_bytes", None)
    except Exception:
        vmem_cap = None

    if vmem_cap is None:
        # Unknown chip: conservative defaults that fit v5e's 16 MiB scoped VMEM.
        cfg = (2 * _MIB, None, 1)
    elif vmem_cap <= 96 * _MIB:
        # v7x-class: 64 MiB VMEM per TC, 2 TCs, 3.2 TB/s HBM.  Larger tiles
        # amortize the ~0.35us/step overhead; 6 MiB x 3 arrays x 2 bufs = 36 MiB.
        cfg = (6 * _MIB, min(48 * _MIB, (vmem_cap * 3) // 4), 2)
    else:
        # v5e/v6e: single TC, 128 MiB VMEM.  4 MiB tiles (24 MiB double-buffered)
        # with the scoped limit raised past v5e's 16 MiB default; no step floor.
        cfg = (4 * _MIB, 48 * _MIB, 1)

    _CHIP_CONFIG = cfg
    return cfg


def residual_connection(residual, x, *, donate_x=False, tile_bytes_override=None):
    """out = residual + x, computed in a Pallas TPU kernel."""
    assert residual.shape == x.shape, "residual and X must have the same shape"
    assert residual.dtype == x.dtype

    orig_shape = x.shape
    dtype = x.dtype
    itemsize = jnp.dtype(dtype).itemsize
    n = x.size

    if n == 0:
        return residual + x

    lanes = _pick_lanes(n)
    if lanes is None:
        # TODO(synk): ragged sizes (n % 128 != 0).  A pad+kernel+slice path
        # would more than double HBM traffic for a bandwidth-bound op, so use
        # XLA's fused elementwise add (already at the 3N-byte roofline).
        return residual + x

    tile_bytes, vmem_limit, min_steps = _get_chip_config()
    if tile_bytes_override is not None:
        tile_bytes = tile_bytes_override

    rows = n // lanes
    res2d = residual.reshape(rows, lanes)
    x2d = x.reshape(rows, lanes)

    # ~tile_bytes per array per block, sublane-aligned for the dtype.
    sub = _sublane_multiple(dtype)
    tile_rows = max(tile_bytes // (itemsize * lanes), 1)
    tile_rows = max((tile_rows // sub) * sub, sub)
    if tile_rows >= rows:
        tile_rows = rows  # single block; block dim == full array dim is legal

    if min_steps > 1 and rows > sub:
        # Multi-TC chip (v7x): ensure an even number (>= min_steps) of grid
        # steps so both TensorCores get work; don't over-split (HBM is shared).
        steps = max(pl.cdiv(rows, tile_rows), min_steps)
        if steps % 2:
            steps += 1
        split_rows = max(pl.cdiv(pl.cdiv(rows, steps), sub) * sub, sub)
        tile_rows = min(tile_rows, split_rows)

    # cdiv grid: a partial final block is handled by masked boundary stores.
    grid = (pl.cdiv(rows, tile_rows),)

    extra_kwargs = {}
    if donate_x:
        # Alias the output onto X's slab.  Only safe if the caller does not
        # reuse X after this call (free win under jit with donated inputs).
        extra_kwargs["input_output_aliases"] = {1: 0}

    out2d = pl.pallas_call(
        _residual_add_kernel,
        out_shape=jax.ShapeDtypeStruct((rows, lanes), dtype),
        grid=grid,
        in_specs=[
            pl.BlockSpec((tile_rows, lanes), lambda i: (i, 0)),
            pl.BlockSpec((tile_rows, lanes), lambda i: (i, 0)),
        ],
        out_specs=pl.BlockSpec((tile_rows, lanes), lambda i: (i, 0)),
        compiler_params=pltpu.CompilerParams(
            dimension_semantics=("parallel",),
            vmem_limit_bytes=vmem_limit,
        ),
        cost_estimate=pl.CostEstimate(
            flops=n, transcendentals=0, bytes_accessed=3 * n * itemsize
        ),
        **extra_kwargs,
    )(res2d, x2d)

    return out2d.reshape(orig_shape)


class ResidualConnection:
    """JAX/Pallas counterpart of the PyTorch module: holds `residual`,
    forward(X) returns residual + X via the Pallas kernel.  X is never
    donated/clobbered by default."""

    def __init__(self, residual):
        self.residual = residual

    def __call__(self, X):
        return residual_connection(self.residual, X)


if __name__ == "__main__":
    key = jax.random.PRNGKey(0)
    k_res, k_x = jax.random.split(key)

    # Main path: small NCHW-shaped example (n = 2048, lane-dense slab).
    B, C, H, W = 2, 4, 16, 16
    residual = jax.random.normal(k_res, (B, C, H, W), dtype=jnp.float32)
    x = jax.random.normal(k_x, (B, C, H, W), dtype=jnp.float32)
    ref = residual + x

    module = ResidualConnection(residual)
    out = jax.block_until_ready(module(x))
    assert out.shape == x.shape and out.dtype == x.dtype
    assert jnp.allclose(out, ref, atol=1e-6, rtol=1e-6)

    # Multi-block grid with a partial (masked) final block: rows=27, tile=8.
    r2 = jax.random.normal(k_res, (3, 9, 128), dtype=jnp.float32)
    x2 = jax.random.normal(k_x, (3, 9, 128), dtype=jnp.float32)
    out2 = jax.block_until_ready(
        residual_connection(r2, x2, tile_bytes_override=8 * 128 * 4)
    )
    assert jnp.allclose(out2, r2 + x2, atol=1e-6, rtol=1e-6)

    # Ragged size (n % 128 != 0): XLA fallback path, no pad/slice copies.
    r3 = jax.random.normal(k_res, (5, 7, 3), dtype=jnp.float32)
    x3 = jax.random.normal(k_x, (5, 7, 3), dtype=jnp.float32)
    out3 = jax.block_until_ready(residual_connection(r3, x3))
    assert jnp.allclose(out3, r3 + x3, atol=1e-6, rtol=1e-6)

    # Opt-in donated-X variant (caller must not reuse x afterwards).
    out4 = jax.block_until_ready(residual_connection(residual, x, donate_x=True))
    assert jnp.allclose(out4, ref, atol=1e-6, rtol=1e-6)

    print("KERNEL_OK")
</pallas_src>

<mosaic_0001>
module attributes {stable_mosaic.version = 11 : i64} {
  func.func @_residual_add_kernel(%arg0: i32, %arg1: memref<1x2048xf32, #tpu.memory_space<vmem>>, %arg2: memref<1x2048xf32, #tpu.memory_space<vmem>>, %arg3: memref<1x2048xf32, #tpu.memory_space<vmem>>) attributes {dimension_semantics = [#tpu.dimension_semantics<parallel>], iteration_bounds = array<i64: 1>, scalar_prefetch = 0 : i64, scratch_operands = 0 : i64, tpu.core_type = #tpu.core_type<tc>, window_params = [{transform_indices = @transform_0, window_bounds = array<i64: 1, 2048>}, {transform_indices = @transform_1, window_bounds = array<i64: 1, 2048>}, {transform_indices = @transform_2, window_bounds = array<i64: 1, 2048>}]} {
    %c0 = arith.constant 0 : index
    %c0_0 = arith.constant 0 : index
    %0 = vector.load %arg1[%c0, %c0_0] : memref<1x2048xf32, #tpu.memory_space<vmem>>, vector<1x2048xf32>
    %c0_1 = arith.constant 0 : index
    %c0_2 = arith.constant 0 : index
    %1 = vector.load %arg2[%c0_1, %c0_2] : memref<1x2048xf32, #tpu.memory_space<vmem>>, vector<1x2048xf32>
    %2 = arith.addf %0, %1 : vector<1x2048xf32>
    %c0_3 = arith.constant 0 : index
    %c0_4 = arith.constant 0 : index
    %3 = vector.load %arg3[%c0_3, %c0_4] : memref<1x2048xf32, #tpu.memory_space<vmem>>, vector<1x2048xf32>
    tpu.vector_store %arg3[%c0_3, %c0_4], %2 {strides = array<i32>} : memref<1x2048xf32, #tpu.memory_space<vmem>>, vector<1x2048xf32>,
    return
  }
  func.func @transform_0(%arg0: i32) -> (i32, i32) {
    %c0_i32 = arith.constant 0 : i32
    %c0_i32_0 = arith.constant 0 : i32
    return %arg0, %c0_i32 : i32, i32
  }
  func.func @transform_1(%arg0: i32) -> (i32, i32) {
    %c0_i32 = arith.constant 0 : i32
    %c0_i32_0 = arith.constant 0 : i32
    return %arg0, %c0_i32 : i32, i32
  }
  func.func @transform_2(%arg0: i32) -> (i32, i32) {
    %c0_i32 = arith.constant 0 : i32
    %c0_i32_0 = arith.constant 0 : i32
    return %arg0, %c0_i32 : i32, i32
  }
}

</mosaic_0001>

<llo_original>
// kernel: tpu_custom_call.1
$region0: #{tpu_custom_call.1}
  #allocation0 [shape = 'u32[]', space=smem, size = 0x4, offset = 0x4, fixed_abs, tag = 'smem constant byte address 0x4 - core index']
  #allocation1 [shape = 'u32[144,128]{1,0:T(1,128)}', space=vmem, size = 0x12000, scoped, tag = 'internal scratch']
  %s0 = inlined_call_operand.hbm [shape: f32[1,2048], index: 0, kind: input, shape index: {}]
  %s1 = inlined_call_operand.hbm [shape: f32[1,2048], index: 1, kind: input, shape index: {}]
  %s2 = inlined_call_operand.hbm [shape: f32[1,2048], index: 2, kind: output, shape index: {}]
  %s3 = sld [smem:[#allocation0]]
  $region26: #{tpu_custom_call.1} parent=0
    _
  %s5 = ssub.s32 1, %s3
  %s6 = scalar_select 0, %s5, %s3
  $region1: #{tpu_custom_call.1} parent=0
    #allocation2 [shape = 'u8[8192]{0}', space=vmem, size = 0x2000, scoped, tag = 'input window, operand 0, single buffered']
    #allocation3 [shape = 's32[1]{0}', space=sflag, size = 0x4, scoped, tag = 'scoped memory for tpu_custom_call.1']
    #allocation4 [shape = 's32[1]{0}', space=sflag, size = 0x4, scoped, tag = 'scoped memory for tpu_custom_call.1']
    #allocation5 [shape = 'u8[8192]{0}', space=vmem, size = 0x2000, scoped, tag = 'input window, operand 1, single buffered']
    #allocation6 [shape = 's32[1]{0}', space=sflag, size = 0x4, scoped, tag = 'scoped memory for tpu_custom_call.1']
    #allocation7 [shape = 'u8[8192]{0}', space=vmem, size = 0x2000, scoped, tag = 'output window, operand 0, single buffered']
    %7 = vsyncpa [#allocation3], 0
    %8 = vsyncpa [#allocation6], 0
    %9 = vsyncpa [#allocation4], 0
    // Predicated region
    $region2: #{tpu_custom_call.1} parent=1 // pred_check
      _
    $region3: #{tpu_custom_call.1} parent=1 // pred_check_branch
      %11 = sbr.rel (0) target = $region5
    $region4: #{tpu_custom_call.1} parent=1 // pred_region
      %s13 = ssub.s32 256, 256
      %14 = vsyncadd [#allocation3], %s13
      %s16 = sshll.u32 [#allocation2], 4
      %s17 = int_to_ptr.vmem [resolvable:$true] %s16
      %19 = dma.hbm_to_vmem [thread:$0]  %s0, 256, %s17, [#allocation3]
    $region5: #{tpu_custom_call.1} parent=1 // pred_fallthru
      _
    // Predicated region
    $region6: #{tpu_custom_call.1} parent=1 // pred_check
      _
    $region7: #{tpu_custom_call.1} parent=1 // pred_check_branch
      %21 = sbr.rel (0) target = $region9
    $region8: #{tpu_custom_call.1} parent=1 // pred_region
      %s23 = ssub.s32 256, 256
      %24 = vsyncadd [#allocation6], %s23
      %s26 = sshll.u32 [#allocation5], 4
      %s27 = int_to_ptr.vmem [resolvable:$true] %s26
      %29 = dma.hbm_to_vmem [thread:$0]  %s1, 256, %s27, [#allocation6]
    $region9: #{tpu_custom_call.1} parent=1 // pred_fallthru
      _
    // Predicated region
    $region10: #{tpu_custom_call.1} parent=1 // pred_check
      _
    $region11: #{tpu_custom_call.1} parent=1 // pred_check_branch
      %31 = sbr.rel (0) target = $region13
    $region12: #{tpu_custom_call.1} parent=1 // pred_region
      %32 = dma.done [#allocation3], 256
    $region13: #{tpu_custom_call.1} parent=1 // pred_fallthru
      _
    // Predicated region
    $region14: #{tpu_custom_call.1} parent=1 // pred_check
      _
    $region15: #{tpu_custom_call.1} parent=1 // pred_check_branch
      %34 = sbr.rel (0) target = $region17
    $region16: #{tpu_custom_call.1} parent=1 // pred_region
      %35 = dma.done [#allocation6], 256
    $region17: #{tpu_custom_call.1} parent=1 // pred_fallthru
      _
    %v36 = vld [vmem:[#allocation2] sm:$0xff]
    %v37 = vld [vmem:[#allocation2 + $0x8] sm:$0xff]
    %v38 = vld [vmem:[#allocation5] sm:$0xff]
    %v39 = vld [vmem:[#allocation5 + $0x8] sm:$0xff]
    %v40 = vadd.f32 %v36, %v38
    %v41 = vadd.f32 %v37, %v39
    %42 = vst [vmem:[#allocation7] sm:$0xff] %v40
    %43 = vst [vmem:[#allocation7 + $0x8] sm:$0xff] %v41
    // Predicated region
    $region18: #{tpu_custom_call.1} parent=1 // pred_check
      _
    $region19: #{tpu_custom_call.1} parent=1 // pred_check_branch
      %45 = sbr.rel (0) target = $region21
    $region20: #{tpu_custom_call.1} parent=1 // pred_region
      %s47 = ssub.s32 256, 256
      %48 = vsyncadd [#allocation4], %s47
      %s50 = sshll.u32 [#allocation7], 4
      %s51 = int_to_ptr.vmem [resolvable:$true] %s50
      %53 = dma.vmem_to_hbm [thread:$0]  %s51, 256, %s2, [#allocation4]
    $region21: #{tpu_custom_call.1} parent=1 // pred_fallthru
      _
    // Predicated region
    $region22: #{tpu_custom_call.1} parent=1 // pred_check
      _
    $region23: #{tpu_custom_call.1} parent=1 // pred_check_branch
      %55 = sbr.rel (0) target = $region25
    $region24: #{tpu_custom_call.1} parent=1 // pred_region
      %56 = dma.done [#allocation4], 256
    $region25: #{tpu_custom_call.1} parent=1 // pred_fallthru
      _
    %57 = vsyncpa [#allocation3], 1
    %58 = vsyncpa [#allocation6], 1
    %59 = vsyncpa [#allocation4], 1

</llo_original>
